<compile_context>
chip_gen: v7x
topology: tpu7x:2x2x1
jax: 0.10.0
libtpu: 0.0.40
codegen_flags: <defaults>
</compile_context>

<pallas_src>
import functools

import jax
import jax.numpy as jnp
from jax import lax
from jax.experimental import pallas as pl
from jax.experimental.pallas import tpu as pltpu


def _conv_sums_kernel(p_ref, x_ref, sum_ref, sq_ref, *, n_batch):
    """One grid step: per-image sum(conv) and sum(conv^2) for one tile of TN images.

    p_ref   (SMEM, f32[4])       : [w00, w01, w10, w11] (conv bias cancels in BN)
    x_ref   (VMEM, [TN, H, W])   : input tile (channel dim squeezed by BlockSpec)
    sum_ref (VMEM, f32[1,1,TN])  : per-image sum of conv
    sq_ref  (VMEM, f32[1,1,TN])  : per-image sum of conv^2
    """
    tn, h, w = x_ref.shape
    ho, wo = h - 1, w - 1

    x = x_ref[...].astype(jnp.float32)

    w00 = p_ref[0]
    w01 = p_ref[1]
    w10 = p_ref[2]
    w11 = p_ref[3]

    # Conv2d(1, 1, 2), stride 1, no padding: four shifted static views.
    # (no "+ bias": BN centers by the batch mean, so a constant bias cancels)
    conv = (w00 * x[:, :ho, :wo]
            + w01 * x[:, :ho, 1:]
            + w10 * x[:, 1:, :wo]
            + w11 * x[:, 1:, 1:])                           # (TN, Ho, Wo) f32

    s_img = jnp.sum(conv, axis=(1, 2))[None, None, :]        # (1, 1, TN)
    q_img = jnp.sum(conv * conv, axis=(1, 2))[None, None, :]  # (1, 1, TN)

    # Mask images of a partial last tile AFTER the reduction (O(TN) work);
    # select-of-0 also discards any NaN/Inf from padded garbage rows.
    if n_batch % tn != 0:
        img = lax.broadcasted_iota(jnp.int32, (1, 1, tn), 2) + pl.program_id(0) * tn
        valid = img < n_batch
        s_img = jnp.where(valid, s_img, 0.0)
        q_img = jnp.where(valid, q_img, 0.0)

    sum_ref[...] = s_img
    sq_ref[...] = q_img


def _vmem_budgets():
    """(tile_bytes, vmem_limit_bytes) chosen per TPU generation."""
    vmem_cap = None
    try:
        info = pltpu.get_tpu_info()
        vmem_cap = getattr(info, "vmem_capacity_bytes", None)
    except Exception:
        vmem_cap = None
    if vmem_cap is None:
        vmem_cap = 64 * 1024 * 1024          # conservative (v7x per-core VMEM)
    if vmem_cap >= 100 * 1024 * 1024:         # v5e / v6e: 128 MiB physical VMEM
        return 6 * 1024 * 1024, 64 * 1024 * 1024
    # v7x: 64 MiB per TensorCore; leave headroom for the ~5-6x live
    # intermediate multiplier (input double buffer + f32 upcast + conv/conv^2).
    return 3 * 1024 * 1024, 40 * 1024 * 1024


def model_forward(x_nchw, conv_w, conv_b, bn_gamma, bn_beta, bn_eps=1e-5,
                  tile_bytes=None):
    """x_nchw: (N, 1, H, W); conv_w: (1, 1, 2, 2); conv_b/bn_gamma/bn_beta: (1,).

    conv_b is accepted for API parity with the PyTorch module but is not needed:
    with training-mode BatchNorm the constant conv bias cancels exactly.
    """
    n, c, h, w = x_nchw.shape
    assert c == 1, "Conv2d(1, 1, 2) expects a single input channel"
    assert h >= 2 and w >= 2, "2x2 conv needs H >= 2 and W >= 2"
    ho, wo = h - 1, w - 1

    # Stream f32/bf16 directly (no wrapper-side copy); only cast odd dtypes.
    if x_nchw.dtype not in (jnp.float32, jnp.bfloat16):
        x_nchw = x_nchw.astype(jnp.float32)

    auto_tile, vmem_limit = _vmem_budgets()
    if tile_bytes is None:
        tile_bytes = auto_tile

    # N-tile sized by the f32 per-image footprint (bounds in-kernel temporaries).
    max_imgs = max(1, tile_bytes // max(1, h * w * 4))
    tn = min(n, max_imgs)
    # Round down to a multiple of 128 / 8 when possible -> unmasked, lane-aligned
    # stores of the (1,1,TN) output rows.
    if tn >= 128:
        tn = (tn // 128) * 128
    elif tn >= 8:
        tn = (tn // 8) * 8
    nt = pl.cdiv(n, tn)

    params = conv_w.reshape(4).astype(jnp.float32)   # [w00, w01, w10, w11]

    kernel = functools.partial(_conv_sums_kernel, n_batch=n)

    sums, sqs = pl.pallas_call(
        kernel,
        out_shape=(jax.ShapeDtypeStruct((nt, 1, tn), jnp.float32),
                   jax.ShapeDtypeStruct((nt, 1, tn), jnp.float32)),
        grid=(nt,),
        in_specs=[
            pl.BlockSpec(memory_space=pltpu.SMEM),               # conv weights
            # channel dim squeezed in the BlockSpec (no HBM copy in the wrapper)
            pl.BlockSpec((tn, None, h, w), lambda i: (i, 0, 0, 0)),
        ],
        out_specs=(
            pl.BlockSpec((1, 1, tn), lambda i: (i, 0, 0)),
            pl.BlockSpec((1, 1, tn), lambda i: (i, 0, 0)),
        ),
        compiler_params=pltpu.CompilerParams(
            # Each grid step writes its own output rows -> independent tiles.
            dimension_semantics=("parallel",),
            vmem_limit_bytes=vmem_limit,
        ),
    )(params, x_nchw)

    # --- Tiny BN(training stats) + global-avg-pool finalize (plain XLA, O(N)) ---
    s_img = sums.reshape(-1)[:n]                 # per-image sum(conv)
    q_img = sqs.reshape(-1)[:n]                  # per-image sum(conv^2)
    n_el = float(n * ho * wo)
    mean = jnp.sum(s_img) / n_el
    # Biased variance (PyTorch BN forward); clamp tiny negative cancellation.
    var = jnp.maximum(jnp.sum(q_img) / n_el - mean * mean, 0.0)
    scale = bn_gamma[0].astype(jnp.float32) * lax.rsqrt(var + jnp.float32(bn_eps))
    pooled = scale * (s_img / float(ho * wo) - mean) + bn_beta[0].astype(jnp.float32)
    return pooled.reshape(n, 1, 1, 1)


def _reference(x, conv_w, conv_b, g, b, eps=1e-5):
    """Pure-JAX reference of the PyTorch module (training-mode BN, with conv bias)."""
    xx = x[:, 0].astype(jnp.float32)
    wk = conv_w[0, 0].astype(jnp.float32)
    conv = (wk[0, 0] * xx[:, :-1, :-1] + wk[0, 1] * xx[:, :-1, 1:]
            + wk[1, 0] * xx[:, 1:, :-1] + wk[1, 1] * xx[:, 1:, 1:]) + conv_b[0]
    mean = conv.mean()
    var = ((conv - mean) ** 2).mean()
    norm = g[0] * (conv - mean) * lax.rsqrt(var + eps) + b[0]
    return norm.mean(axis=(1, 2)).reshape(-1, 1, 1, 1)


if __name__ == "__main__":
    key = jax.random.PRNGKey(0)
    k_x, k_w, k_b, k_x2 = jax.random.split(key, 4)

    conv_w = jax.random.normal(k_w, (1, 1, 2, 2), dtype=jnp.float32) * 0.5
    conv_b = jax.random.normal(k_b, (1,), dtype=jnp.float32) * 0.1
    bn_gamma = jnp.ones((1,), dtype=jnp.float32)   # PyTorch BN default weight
    bn_beta = jnp.zeros((1,), dtype=jnp.float32)   # PyTorch BN default bias

    # --- Spec shape from the module: x = torch.randn(1, 1, 4, 4) ---
    x_spec = jax.random.normal(k_x2, (1, 1, 4, 4), dtype=jnp.float32)
    y_spec = model_forward(x_spec, conv_w, conv_b, bn_gamma, bn_beta)
    jax.block_until_ready(y_spec)
    assert y_spec.shape == (1, 1, 1, 1)
    y_spec_ref = _reference(x_spec, conv_w, conv_b, bn_gamma, bn_beta)
    assert jnp.allclose(y_spec, y_spec_ref, atol=1e-5, rtol=1e-4)

    # --- Slightly larger batch exercising single-tile and multi-tile paths ---
    N, C, H, W = 5, 1, 8, 8
    x = jax.random.normal(k_x, (N, C, H, W), dtype=jnp.float32)

    # Single-tile path (whole batch in one grid step).
    y = model_forward(x, conv_w, conv_b, bn_gamma, bn_beta)
    jax.block_until_ready(y)
    assert y.shape == (N, 1, 1, 1)

    # Multi-step grid: force TN=2 -> 3 grid steps with a partial last tile,
    # exercising per-tile output writes and post-reduction image masking.
    y_tiled = model_forward(x, conv_w, conv_b, bn_gamma, bn_beta,
                            tile_bytes=2 * H * W * 4)
    jax.block_until_ready(y_tiled)
    assert y_tiled.shape == (N, 1, 1, 1)

    y_ref = _reference(x, conv_w, conv_b, bn_gamma, bn_beta)
    assert jnp.allclose(y, y_ref, atol=1e-5, rtol=1e-4)
    assert jnp.allclose(y_tiled, y_ref, atol=1e-5, rtol=1e-4)
    print("KERNEL_OK")
</pallas_src>

<mosaic_0001>
module attributes {stable_mosaic.version = 11 : i64} {
  func.func @_conv_sums_kernel(%arg0: i32, %arg1: memref<4xf32, #tpu.memory_space<smem>>, %arg2: memref<1x1x4x4xf32, #tpu.memory_space<vmem>>, %arg3: memref<1x1x1xf32, #tpu.memory_space<vmem>>, %arg4: memref<1x1x1xf32, #tpu.memory_space<vmem>>) attributes {dimension_semantics = [#tpu.dimension_semantics<parallel>], iteration_bounds = array<i64: 1>, scalar_prefetch = 0 : i64, scratch_operands = 0 : i64, tpu.core_type = #tpu.core_type<tc>, window_params = [{transform_indices = @transform_0, window_bounds = array<i64: 4>}, {transform_indices = @transform_1, window_bounds = array<i64: 1, 1, 4, 4>}, {transform_indices = @transform_2, window_bounds = array<i64: 1, 1, 1>}, {transform_indices = @transform_3, window_bounds = array<i64: 1, 1, 1>}]} {
    %c0 = arith.constant 0 : index
    %c0_0 = arith.constant 0 : index
    %c0_1 = arith.constant 0 : index
    %c0_2 = arith.constant 0 : index
    %0 = vector.load %arg2[%c0, %c0_0, %c0_1, %c0_2] : memref<1x1x4x4xf32, #tpu.memory_space<vmem>>, vector<1x1x4x4xf32>
    %1 = vector.shape_cast %0 : vector<1x1x4x4xf32> to vector<1x4x4xf32>
    %c0_3 = arith.constant 0 : index
    %2 = memref.load %arg1[%c0_3] : memref<4xf32, #tpu.memory_space<smem>>
    %c1 = arith.constant 1 : index
    %3 = memref.load %arg1[%c1] : memref<4xf32, #tpu.memory_space<smem>>
    %c2 = arith.constant 2 : index
    %4 = memref.load %arg1[%c2] : memref<4xf32, #tpu.memory_space<smem>>
    %c3 = arith.constant 3 : index
    %5 = memref.load %arg1[%c3] : memref<4xf32, #tpu.memory_space<smem>>
    %6 = vector.extract_strided_slice %1 {offsets = [0, 0, 0], sizes = [1, 3, 3], strides = [1, 1, 1]} : vector<1x4x4xf32> to vector<1x3x3xf32>
    %7 = vector.broadcast %2 : f32 to vector<1x3x3xf32>
    %8 = arith.mulf %7, %6 : vector<1x3x3xf32>
    %9 = vector.extract_strided_slice %1 {offsets = [0, 0, 1], sizes = [1, 3, 3], strides = [1, 1, 1]} : vector<1x4x4xf32> to vector<1x3x3xf32>
    %10 = vector.broadcast %3 : f32 to vector<1x3x3xf32>
    %11 = arith.mulf %10, %9 : vector<1x3x3xf32>
    %12 = arith.addf %8, %11 : vector<1x3x3xf32>
    %13 = vector.extract_strided_slice %1 {offsets = [0, 1, 0], sizes = [1, 3, 3], strides = [1, 1, 1]} : vector<1x4x4xf32> to vector<1x3x3xf32>
    %14 = vector.broadcast %4 : f32 to vector<1x3x3xf32>
    %15 = arith.mulf %14, %13 : vector<1x3x3xf32>
    %16 = arith.addf %12, %15 : vector<1x3x3xf32>
    %17 = vector.extract_strided_slice %1 {offsets = [0, 1, 1], sizes = [1, 3, 3], strides = [1, 1, 1]} : vector<1x4x4xf32> to vector<1x3x3xf32>
    %18 = vector.broadcast %5 : f32 to vector<1x3x3xf32>
    %19 = arith.mulf %18, %17 : vector<1x3x3xf32>
    %20 = arith.addf %16, %19 : vector<1x3x3xf32>
    %cst = arith.constant dense<0.000000e+00> : vector<1xf32>
    %21 = vector.multi_reduction <add>, %20, %cst [1, 2] : vector<1x3x3xf32> to vector<1xf32>
    %22 = vector.shape_cast %21 : vector<1xf32> to vector<1x1x1xf32>
    %23 = arith.mulf %20, %20 : vector<1x3x3xf32>
    %cst_4 = arith.constant dense<0.000000e+00> : vector<1xf32>
    %24 = vector.multi_reduction <add>, %23, %cst_4 [1, 2] : vector<1x3x3xf32> to vector<1xf32>
    %25 = vector.shape_cast %24 : vector<1xf32> to vector<1x1x1xf32>
    %c0_5 = arith.constant 0 : index
    %c0_6 = arith.constant 0 : index
    %c0_7 = arith.constant 0 : index
    %26 = vector.load %arg3[%c0_5, %c0_6, %c0_7] : memref<1x1x1xf32, #tpu.memory_space<vmem>>, vector<1x1x1xf32>
    tpu.vector_store %arg3[%c0_5, %c0_6, %c0_7], %22 {strides = array<i32>} : memref<1x1x1xf32, #tpu.memory_space<vmem>>, vector<1x1x1xf32>,
    %c0_8 = arith.constant 0 : index
    %c0_9 = arith.constant 0 : index
    %c0_10 = arith.constant 0 : index
    %27 = vector.load %arg4[%c0_8, %c0_9, %c0_10] : memref<1x1x1xf32, #tpu.memory_space<vmem>>, vector<1x1x1xf32>
    tpu.vector_store %arg4[%c0_8, %c0_9, %c0_10], %25 {strides = array<i32>} : memref<1x1x1xf32, #tpu.memory_space<vmem>>, vector<1x1x1xf32>,
    return
  }
  func.func @transform_0(%arg0: i32) -> i32 {
    %c0_i32 = arith.constant 0 : i32
    %c0_i32_0 = arith.constant 0 : i32
    return %c0_i32 : i32
  }
  func.func @transform_1(%arg0: i32) -> (i32, i32, i32, i32) {
    %c0_i32 = arith.constant 0 : i32
    %c0_i32_0 = arith.constant 0 : i32
    %c0_i32_1 = arith.constant 0 : i32
    %c0_i32_2 = arith.constant 0 : i32
    return %arg0, %c0_i32, %c0_i32_0, %c0_i32_1 : i32, i32, i32, i32
  }
  func.func @transform_2(%arg0: i32) -> (i32, i32, i32) {
    %c0_i32 = arith.constant 0 : i32
    %c0_i32_0 = arith.constant 0 : i32
    %c0_i32_1 = arith.constant 0 : i32
    return %arg0, %c0_i32, %c0_i32_0 : i32, i32, i32
  }
  func.func @transform_3(%arg0: i32) -> (i32, i32, i32) {
    %c0_i32 = arith.constant 0 : i32
    %c0_i32_0 = arith.constant 0 : i32
    %c0_i32_1 = arith.constant 0 : i32
    return %arg0, %c0_i32, %c0_i32_0 : i32, i32, i32
  }
}

</mosaic_0001>

<llo_original>
// kernel: tpu_custom_call.1
$region0: #{tpu_custom_call.1}
  #allocation0 [shape = 'u32[]', space=smem, size = 0x4, offset = 0x4, fixed_abs, tag = 'smem constant byte address 0x4 - core index']
  #allocation1 [shape = 'u32[144,128]{1,0:T(1,128)}', space=vmem, size = 0x12000, scoped, tag = 'internal scratch']
  %s0 = inlined_call_operand.hbm [shape: f32[4], index: 0, kind: input, shape index: {}]
  %s1 = inlined_call_operand.hbm [shape: f32[1,1,4,4], index: 1, kind: input, shape index: {}]
  %s2 = inlined_call_operand.hbm [shape: f32[1,1,1], index: 2, kind: output, shape index: {0}]
  %s3 = inlined_call_operand.hbm [shape: f32[1,1,1], index: 3, kind: output, shape index: {1}]
  %4 = xla_tuple %s2, %s3
  %s5 = sld [smem:[#allocation0]]
  $region34: #{tpu_custom_call.1} parent=0
    _
  %s7 = ssub.s32 1, %s5
  %s8 = scalar_select 0, %s7, %s5
  $region1: #{tpu_custom_call.1} parent=0
    #allocation2 [shape = 'u8[512]{0}', space=smem, size = 0x200, scoped, tag = 'input window, operand 0, single buffered']
    #allocation3 [shape = 's32[1]{0}', space=sflag, size = 0x4, scoped, tag = 'scoped memory for tpu_custom_call.1']
    #allocation4 [shape = 's32[1]{0}', space=sflag, size = 0x4, scoped, tag = 'scoped memory for tpu_custom_call.1']
    #allocation5 [shape = 's32[1]{0}', space=sflag, size = 0x4, scoped, tag = 'scoped memory for tpu_custom_call.1']
    #allocation6 [shape = 'u8[2048]{0}', space=vmem, size = 0x800, scoped, tag = 'input window, operand 1, single buffered']
    #allocation7 [shape = 'u8[512]{0}', space=vmem, size = 0x400, scoped, tag = 'output window, operand 0, single buffered']
    #allocation8 [shape = 'u8[512]{0}', space=vmem, size = 0x400, scoped, tag = 'output window, operand 1, single buffered']
    #allocation9 [shape = 's32[1]{0}', space=sflag, size = 0x4, scoped, tag = 'scoped memory for tpu_custom_call.1']
    %9 = vsyncpa [#allocation5], 0
    %10 = vsyncpa [#allocation3], 0
    %11 = vsyncpa [#allocation4], 0
    %12 = vsyncpa [#allocation9], 0
    // Predicated region
    $region2: #{tpu_custom_call.1} parent=1 // pred_check
      _
    $region3: #{tpu_custom_call.1} parent=1 // pred_check_branch
      %14 = sbr.rel (0) target = $region5
    $region4: #{tpu_custom_call.1} parent=1 // pred_region
      %s16 = ssub.s32 16, 16
      %17 = vsyncadd [#allocation5], %s16
      %20 = dma.hbm_to_smem %s0, 16, [#allocation2], [#allocation5]
    $region5: #{tpu_custom_call.1} parent=1 // pred_fallthru
      _
    // Predicated region
    $region6: #{tpu_custom_call.1} parent=1 // pred_check
      _
    $region7: #{tpu_custom_call.1} parent=1 // pred_check_branch
      %22 = sbr.rel (0) target = $region9
    $region8: #{tpu_custom_call.1} parent=1 // pred_region
      %s24 = ssub.s32 64, 64
      %25 = vsyncadd [#allocation3], %s24
      %s27 = sshll.u32 [#allocation6], 4
      %s28 = int_to_ptr.vmem [resolvable:$true] %s27
      %30 = dma.hbm_to_vmem [thread:$0]  %s1, 64, %s28, [#allocation3]
    $region9: #{tpu_custom_call.1} parent=1 // pred_fallthru
      _
    // Predicated region
    $region10: #{tpu_custom_call.1} parent=1 // pred_check
      _
    $region11: #{tpu_custom_call.1} parent=1 // pred_check_branch
      %32 = sbr.rel (0) target = $region13
    $region12: #{tpu_custom_call.1} parent=1 // pred_region
      %33 = dma.done [#allocation5], 16
    $region13: #{tpu_custom_call.1} parent=1 // pred_fallthru
      _
    // Predicated region
    $region14: #{tpu_custom_call.1} parent=1 // pred_check
      _
    $region15: #{tpu_custom_call.1} parent=1 // pred_check_branch
      %35 = sbr.rel (0) target = $region17
    $region16: #{tpu_custom_call.1} parent=1 // pred_region
      %36 = dma.done [#allocation3], 64
    $region17: #{tpu_custom_call.1} parent=1 // pred_fallthru
      _
    %37 = sfence
    %v38 = vld [vmem:[#allocation6] sm:$0xf]
    %s39 = sld [smem:[#allocation2]]
    %s40 = sld [smem:[#allocation2 + $0x1]]
    %s41 = sld [smem:[#allocation2 + $0x2]]
    %s42 = sld [smem:[#allocation2 + $0x3]]
    %v43 = vstv %s39
    %v44 = vmul.f32 %v43, %v38
    %v45 = vstv %s40
    %v46 = vmul.f32 %v45, %v38
    %48 = vrot.lane.b32.xlu0 %v46, 127
    %v49 = vpop.permute.xlu0 %48
    %v51 = vadd.f32 %v44, %v49
    %v52 = vstv %s41
    %v53 = vmul.f32 %v52, %v38
    %v55 = vrot.slane %v53, 1
    %v57 = vadd.f32 %v51, %v55
    %v58 = vstv %s42
    %v59 = vmul.f32 %v58, %v38
    %v61 = vrot.slane %v59, 1
    %62 = vrot.lane.b32.xlu0 %v61, 127
    %v63 = vpop.permute.xlu0 %62
    %v65 = vadd.f32 %v57, %v63
    %vm66 = vcmask 18432
    %v67 = vsel %vm66, %v65, 0.0
    %68 = vadd.xlane.f32.xlu0 %v67
    %v69 = vpop.xlane.xlu0 %68
    %v70 = vrot.slane %v69, 4
    %v71 = vadd.f32 %v69, %v70
    %v72 = vrot.slane %v71, 2
    %v73 = vadd.f32 %v71, %v72
    %v74 = vrot.slane %v73, 1
    %v75 = vadd.f32 %v73, %v74
    %v76 = vmul.f32 %v65, %v65
    %v77 = vsel %vm66, %v76, 0.0
    %78 = vadd.xlane.f32.xlu0 %v77
    %v79 = vpop.xlane.xlu0 %78
    %v80 = vrot.slane %v79, 4
    %v81 = vadd.f32 %v79, %v80
    %v82 = vrot.slane %v81, 2
    %v83 = vadd.f32 %v81, %v82
    %v84 = vrot.slane %v83, 1
    %v85 = vadd.f32 %v83, %v84
    %vm86 = vcmask 0
    %87 = vst.msk [vmem:[#allocation7] sm:$0x1] %vm86, %v75
    %88 = vst.msk [vmem:[#allocation8] sm:$0x1] %vm86, %v85
    // Predicated region
    $region18: #{tpu_custom_call.1} parent=1 // pred_check
      _
    $region19: #{tpu_custom_call.1} parent=1 // pred_check_branch
      %90 = sbr.rel (0) target = $region21
    $region20: #{tpu_custom_call.1} parent=1 // pred_region
      %s92 = ssub.s32 16, 16
      %93 = vsyncadd [#allocation4], %s92
      %s95 = sshll.u32 [#allocation7], 4
      %s96 = int_to_ptr.vmem [resolvable:$true] %s95
      %98 = dma.vmem_to_hbm [thread:$0]  %s96, 16, %s2, [#allocation4]
    $region21: #{tpu_custom_call.1} parent=1 // pred_fallthru
      _
    // Predicated region
    $region22: #{tpu_custom_call.1} parent=1 // pred_check
      _
    $region23: #{tpu_custom_call.1} parent=1 // pred_check_branch
      %100 = sbr.rel (0) target = $region25
    $region24: #{tpu_custom_call.1} parent=1 // pred_region
      %s102 = ssub.s32 16, 16
      %103 = vsyncadd [#allocation9], %s102
      %s105 = sshll.u32 [#allocation8], 4
      %s106 = int_to_ptr.vmem [resolvable:$true] %s105
      %108 = dma.vmem_to_hbm [thread:$0]  %s106, 16, %s3, [#allocation9]
    $region25: #{tpu_custom_call.1} parent=1 // pred_fallthru
      _
    // Predicated region
    $region26: #{tpu_custom_call.1} parent=1 // pred_check
      _
    $region27: #{tpu_custom_call.1} parent=1 // pred_check_branch
      %110 = sbr.rel (0) target = $region29
    $region28: #{tpu_custom_call.1} parent=1 // pred_region
      %111 = dma.done [#allocation4], 16
    $region29: #{tpu_custom_call.1} parent=1 // pred_fallthru
      _
    // Predicated region
    $region30: #{tpu_custom_call.1} parent=1 // pred_check
      _
    $region31: #{tpu_custom_call.1} parent=1 // pred_check_branch
      %113 = sbr.rel (0) target = $region33
    $region32: #{tpu_custom_call.1} parent=1 // pred_region
      %114 = dma.done [#allocation9], 16
    $region33: #{tpu_custom_call.1} parent=1 // pred_fallthru
      _
    %115 = vsyncpa [#allocation3], 1
    %116 = vsyncpa [#allocation4], 1
    %117 = vsyncpa [#allocation9], 1
    %118 = vsyncpa [#allocation5], 1

</llo_original>
